<compile_context>
chip_gen: v6e
topology: v6e:2x2x1
jax: 0.10.0
libtpu: 0.0.40
codegen_flags: <defaults>
</compile_context>

<pallas_src>
import jax
import jax.numpy as jnp
from jax.experimental import pallas as pl
from jax.experimental.pallas import tpu as pltpu


_LANES = 128
_SUBLANES = 8


def _logreg_kernel(x_ref, w_ref, b_ref, o_ref):
    # x_ref: (tb, K) f32 VMEM     w_ref: (K, P) f32 VMEM (resident block)
    # b_ref: (1, 1)  f32 SMEM     o_ref: (tb, P) f32 VMEM
    x = x_ref[...]
    w = w_ref[...]
    b = b_ref[0, 0]                      # scalar bias from SMEM

    # One MXU matmul does the per-sample dot product (and, on the packed
    # path, the per-segment reduction) in one shot; accumulate in f32.
    z = jnp.dot(x, w, preferred_element_type=jnp.float32) + b

    # Sigmoid: exp on the EUP, approximate reciprocal on the EUP (free slot).
    o_ref[...] = pl.reciprocal(1.0 + jnp.exp(-z), approx=True).astype(o_ref.dtype)


def _round_up(x, m):
    return ((x + m - 1) // m) * m


def _vmem_capacity_bytes():
    """Physical VMEM per TensorCore; conservative (v7x-sized) fallback."""
    try:
        return int(pltpu.get_tpu_info().vmem_capacity_bytes)
    except Exception:
        return 64 * 1024 * 1024


def _pick_row_tile(num_rows, padded_row_bytes, x_tile_budget_bytes, min_steps=4):
    """Rows per grid step: as big as the per-buffer byte budget allows
    (amortize ~0.35us per-step pipeline overhead), but keep >= `min_steps`
    grid steps when there is enough work so v7x megacore can split the
    batch axis.  Tiles smaller than the full array are sublane-aligned."""
    max_rows = max(_SUBLANES, x_tile_budget_bytes // padded_row_bytes)
    tb = min(num_rows, max_rows)
    if num_rows > min_steps * _SUBLANES:
        tb = min(tb, _round_up(pl.cdiv(num_rows, min_steps), _SUBLANES))
    if tb < num_rows:
        tb = max(_SUBLANES, (tb // _SUBLANES) * _SUBLANES)
    return tb


def simple_logreg_forward(x, weight, bias):
    """Pallas forward for SimpleLogreg: sigmoid(x @ weight.T + bias).

    x:      (batch, num_features) float32
    weight: (1, num_features)     float32   (nn.Linear(num_features, 1).weight)
    bias:   (1,)                  float32
    returns (batch, 1) float32
    """
    batch, num_features = x.shape
    x = x.astype(jnp.float32)
    w_row = weight.reshape(1, num_features).astype(jnp.float32)
    bias2d = bias.reshape(1, 1).astype(jnp.float32)

    vmem_cap = _vmem_capacity_bytes()
    # Leave headroom: <= 3/4 of physical VMEM, never above 64 MiB.
    vmem_limit = int(min((vmem_cap * 3) // 4, 64 * 1024 * 1024))
    # Per-buffer x-tile budget (double-buffered input must fit comfortably,
    # together with the resident weight and the output buffers).
    x_tile_budget = min(12 * 1024 * 1024, vmem_limit // 4)

    pack = num_features < _LANES and _LANES % num_features == 0
    if pack:
        # Pack P samples per 128-lane row: (batch, F) -> (batch/P, 128).
        p = _LANES // num_features
        batch_p = _round_up(batch, p)
        if batch_p != batch:
            x = jnp.pad(x, ((0, batch_p - batch), (0, 0)))
        num_rows = batch_p // p
        x_in = x.reshape(num_rows, _LANES)
        # Block-diagonal packed weight: w_in[q*F + j, q] = weight[j].
        w_in = jnp.kron(jnp.eye(p, dtype=jnp.float32),
                        w_row.reshape(num_features, 1))
        k, out_cols = _LANES, p
    else:
        # General path: full feature width per row (lane-padded in VMEM).
        # TODO(synk): for very large num_features add a feature-axis grid dim
        # ("arbitrary") with a (tb, 1) f32 accumulator + pl.when init/finalize
        # instead of forcing the full width into one block.
        num_rows = batch
        x_in = x
        w_in = w_row.reshape(num_features, 1)
        k, out_cols = num_features, 1

    # VMEM budgeting uses the *lane-padded* row width.
    padded_row_bytes = _round_up(k, _LANES) * 4
    tb = _pick_row_tile(num_rows, padded_row_bytes, x_tile_budget)
    grid = (pl.cdiv(num_rows, tb),)

    out = pl.pallas_call(
        _logreg_kernel,
        out_shape=jax.ShapeDtypeStruct((num_rows, out_cols), jnp.float32),
        grid=grid,
        in_specs=[
            # x: tiled over (packed) rows, full width.
            pl.BlockSpec((tb, k), lambda i: (i, 0)),
            # weight: one resident block (constant index_map).
            pl.BlockSpec((k, out_cols), lambda i: (0, 0)),
            # bias: scalar in SMEM.
            pl.BlockSpec(memory_space=pltpu.MemorySpace.SMEM),
        ],
        out_specs=pl.BlockSpec((tb, out_cols), lambda i: (i, 0)),
        compiler_params=pltpu.CompilerParams(
            dimension_semantics=("parallel",),
            vmem_limit_bytes=vmem_limit,
        ),
    )(x_in, w_in, bias2d)

    # Undo packing: (num_rows, P) row-major == original sample order.
    return out.reshape(num_rows * out_cols, 1)[:batch]


if __name__ == "__main__":
    key = jax.random.PRNGKey(0)
    kx, kw, kb, kx2, kx3, kw3 = jax.random.split(key, 6)

    # --- Primary check: F=32 -> packed path (4 samples / 128-lane row). ---
    num_features = 32
    bound = 1.0 / (num_features ** 0.5)
    weight = jax.random.uniform(kw, (1, num_features), jnp.float32, -bound, bound)
    bias = jax.random.uniform(kb, (1,), jnp.float32, -bound, bound)

    batch = 8
    x = jax.random.normal(kx, (batch, num_features), jnp.float32)
    out = jax.block_until_ready(simple_logreg_forward(x, weight, bias))
    ref = jax.nn.sigmoid(x @ weight.T + bias)
    assert out.shape == (batch, 1)
    # approx reciprocal in the sigmoid => slightly looser tolerance.
    assert jnp.allclose(out, ref, atol=3e-3, rtol=3e-3), "mismatch (packed, small)"

    # --- Multi-tile packed path (pipelined grid, 4 steps). ---
    batch2 = 1024
    x2 = jax.random.normal(kx2, (batch2, num_features), jnp.float32)
    out2 = jax.block_until_ready(simple_logreg_forward(x2, weight, bias))
    ref2 = jax.nn.sigmoid(x2 @ weight.T + bias)
    assert out2.shape == (batch2, 1)
    assert jnp.allclose(out2, ref2, atol=3e-3, rtol=3e-3), "mismatch (packed, tiled)"

    # --- General (unpacked) path: F >= 128. ---
    nf3, batch3 = 256, 64
    b3 = 1.0 / (nf3 ** 0.5)
    w3 = jax.random.uniform(kw3, (1, nf3), jnp.float32, -b3, b3)
    x3 = jax.random.normal(kx3, (batch3, nf3), jnp.float32)
    out3 = jax.block_until_ready(simple_logreg_forward(x3, w3, bias))
    ref3 = jax.nn.sigmoid(x3 @ w3.T + bias)
    assert out3.shape == (batch3, 1)
    assert jnp.allclose(out3, ref3, atol=3e-3, rtol=3e-3), "mismatch (general path)"

    print("KERNEL_OK")
</pallas_src>

<mosaic_0001>
module attributes {stable_mosaic.version = 11 : i64} {
  func.func @_logreg_kernel(%arg0: i32, %arg1: memref<2x128xf32, #tpu.memory_space<vmem>>, %arg2: memref<128x4xf32, #tpu.memory_space<vmem>>, %arg3: memref<1x1xf32, #tpu.memory_space<smem>>, %arg4: memref<2x4xf32, #tpu.memory_space<vmem>>) attributes {dimension_semantics = [#tpu.dimension_semantics<parallel>], iteration_bounds = array<i64: 1>, scalar_prefetch = 0 : i64, scratch_operands = 0 : i64, tpu.core_type = #tpu.core_type<tc>, window_params = [{transform_indices = @transform_0, window_bounds = array<i64: 2, 128>}, {pipeline_mode = #tpu.pipeline_mode<synchronous>, transform_indices = @transform_1, window_bounds = array<i64: 128, 4>}, {transform_indices = @transform_2, window_bounds = array<i64: 1, 1>}, {transform_indices = @transform_3, window_bounds = array<i64: 2, 4>}]} {
    %c0 = arith.constant 0 : index
    %c0_0 = arith.constant 0 : index
    %0 = vector.load %arg1[%c0, %c0_0] : memref<2x128xf32, #tpu.memory_space<vmem>>, vector<2x128xf32>
    %c0_1 = arith.constant 0 : index
    %c0_2 = arith.constant 0 : index
    %1 = vector.load %arg2[%c0_1, %c0_2] : memref<128x4xf32, #tpu.memory_space<vmem>>, vector<128x4xf32>
    %c0_3 = arith.constant 0 : index
    %c0_4 = arith.constant 0 : index
    %2 = memref.load %arg3[%c0_3, %c0_4] : memref<1x1xf32, #tpu.memory_space<smem>>
    %cst = arith.constant dense<0.000000e+00> : vector<2x4xf32>
    %3 = tpu.matmul %0, %1, %cst {dimension_numbers = #tpu.dot_dimension_numbers<[1], [0], [0], [1], [0, 0, 1, 1], [], []>} : vector<2x128xf32>, vector<128x4xf32>, vector<2x4xf32> -> vector<2x4xf32>
    %4 = vector.broadcast %2 : f32 to vector<2x4xf32>
    %5 = arith.addf %3, %4 : vector<2x4xf32>
    %cst_5 = arith.constant 0.000000e+00 : f32
    %6 = vector.broadcast %cst_5 : f32 to vector<2x4xf32>
    %7 = arith.subf %6, %5 : vector<2x4xf32>
    %8 = math.exp %7 : vector<2x4xf32>
    %cst_6 = arith.constant 1.000000e+00 : f32
    %9 = vector.broadcast %cst_6 : f32 to vector<2x4xf32>
    %10 = arith.addf %9, %8 : vector<2x4xf32>
    %11 = tpu.reciprocal %10 {approx = true} : vector<2x4xf32> -> vector<2x4xf32>
    %c0_7 = arith.constant 0 : index
    %c0_8 = arith.constant 0 : index
    %12 = vector.load %arg4[%c0_7, %c0_8] : memref<2x4xf32, #tpu.memory_space<vmem>>, vector<2x4xf32>
    tpu.vector_store %arg4[%c0_7, %c0_8], %11 {strides = array<i32>} : memref<2x4xf32, #tpu.memory_space<vmem>>, vector<2x4xf32>,
    return
  }
  func.func @transform_0(%arg0: i32) -> (i32, i32) {
    %c0_i32 = arith.constant 0 : i32
    %c0_i32_0 = arith.constant 0 : i32
    return %arg0, %c0_i32 : i32, i32
  }
  func.func @transform_1(%arg0: i32) -> (i32, i32) {
    %c0_i32 = arith.constant 0 : i32
    %c0_i32_0 = arith.constant 0 : i32
    %c0_i32_1 = arith.constant 0 : i32
    return %c0_i32, %c0_i32_0 : i32, i32
  }
  func.func @transform_2(%arg0: i32) -> (i32, i32) {
    %c0_i32 = arith.constant 0 : i32
    %c0_i32_0 = arith.constant 0 : i32
    %c0_i32_1 = arith.constant 0 : i32
    return %c0_i32, %c0_i32_0 : i32, i32
  }
  func.func @transform_3(%arg0: i32) -> (i32, i32) {
    %c0_i32 = arith.constant 0 : i32
    %c0_i32_0 = arith.constant 0 : i32
    return %arg0, %c0_i32 : i32, i32
  }
}

</mosaic_0001>

<llo_original>
// kernel: tpu_custom_call.1
$region0: #{tpu_custom_call.1}
  #allocation0 [shape = 'u32[]', space=smem, size = 0x4, offset = 0x4, fixed_abs, tag = 'smem constant byte address 0x4 - core index']
  #allocation1 [shape = 'u32[144,128]{1,0:T(1,128)}', space=vmem, size = 0x12000, scoped, tag = 'internal scratch']
  #allocation2 [shape = 'f32[1,1]{1,0:T(1,128)S(6)}', space=smem, size = 0x200, scoped, tag = 'scoped memory for tpu_custom_call.1']
  %s0 = inlined_call_operand.vmem [shape: f32[2,128], index: 0, kind: input, shape index: {}]
  %s1 = inlined_call_operand.vmem [shape: f32[128,4], index: 1, kind: input, shape index: {}]
  %s2 = inlined_call_operand.<no memory space> [shape: f32[1,1], index: 2, kind: input, shape index: {}]
  %s3 = inlined_call_operand.hbm [shape: f32[2,4], index: 3, kind: output, shape index: {}]
  %s4 = sld [smem:[#allocation0]]
  $region22: #{tpu_custom_call.1} parent=0
    _
  %s6 = ssub.s32 1, %s4
  %s7 = scalar_select 0, %s6, %s4
  %8 = sst [smem:[#allocation2]] %s2
  $region1: #{tpu_custom_call.1} parent=0
    #allocation3 [shape = 'u8[1024]{0}', space=vmem, size = 0x400, scoped, tag = 'output window, operand 0, single buffered']
    #allocation4 [shape = 's32[1]{0}', space=sflag, size = 0x4, scoped, tag = 'scoped memory for tpu_custom_call.1']
    %9 = vsyncpa [#allocation4], 0
    // Predicated region
    $region2: #{tpu_custom_call.1} parent=1 // pred_check
      _
    $region3: #{tpu_custom_call.1} parent=1 // pred_check_branch
      %11 = sbr.rel (0) target = $region5
    $region4: #{tpu_custom_call.1} parent=1 // pred_region
      _
    $region5: #{tpu_custom_call.1} parent=1 // pred_fallthru
      _
    // Predicated region
    $region6: #{tpu_custom_call.1} parent=1 // pred_check
      _
    $region7: #{tpu_custom_call.1} parent=1 // pred_check_branch
      %13 = sbr.rel (0) target = $region9
    $region8: #{tpu_custom_call.1} parent=1 // pred_region
      _
    $region9: #{tpu_custom_call.1} parent=1 // pred_fallthru
      _
    // Predicated region
    $region10: #{tpu_custom_call.1} parent=1 // pred_check
      _
    $region11: #{tpu_custom_call.1} parent=1 // pred_check_branch
      %15 = sbr.rel (0) target = $region13
    $region12: #{tpu_custom_call.1} parent=1 // pred_region
      _
    $region13: #{tpu_custom_call.1} parent=1 // pred_fallthru
      _
    %v16 = vld [vmem:[%s0] sm:$0x3]
    %v17 = vld [vmem:[%s1] sm:$0xff]
    %v18 = vld [vmem:[%s1 + $0x8] sm:$0xff]
    %v19 = vld [vmem:[%s1 + $0x10] sm:$0xff]
    %v20 = vld [vmem:[%s1 + $0x18] sm:$0xff]
    %v21 = vld [vmem:[%s1 + $0x20] sm:$0xff]
    %v22 = vld [vmem:[%s1 + $0x28] sm:$0xff]
    %v23 = vld [vmem:[%s1 + $0x30] sm:$0xff]
    %v24 = vld [vmem:[%s1 + $0x38] sm:$0xff]
    %v25 = vld [vmem:[%s1 + $0x40] sm:$0xff]
    %v26 = vld [vmem:[%s1 + $0x48] sm:$0xff]
    %v27 = vld [vmem:[%s1 + $0x50] sm:$0xff]
    %v28 = vld [vmem:[%s1 + $0x58] sm:$0xff]
    %v29 = vld [vmem:[%s1 + $0x60] sm:$0xff]
    %v30 = vld [vmem:[%s1 + $0x68] sm:$0xff]
    %v31 = vld [vmem:[%s1 + $0x70] sm:$0xff]
    %v32 = vld [vmem:[%s1 + $0x78] sm:$0xff]
    %s33 = sld [smem:[#allocation2]]
    %v34 = vstv %s33
    %35 = vmatprep.subr.mxu0 0.0
    %36 = vmatpush1.msra.mxu0 %v32
    %37 = vmatprep.subr.mxu0 0.0
    %38 = vmatpush1.msra.mxu0 %v31
    %39 = vmatprep.subr.mxu0 0.0
    %40 = vmatpush1.msra.mxu0 %v30
    %41 = vmatprep.subr.mxu0 0.0
    %42 = vmatpush1.msra.mxu0 %v29
    %43 = vmatprep.subr.mxu0 0.0
    %44 = vmatpush1.msra.mxu0 %v28
    %45 = vmatprep.subr.mxu0 0.0
    %46 = vmatpush1.msra.mxu0 %v27
    %47 = vmatprep.subr.mxu0 0.0
    %48 = vmatpush1.msra.mxu0 %v26
    %49 = vmatprep.subr.mxu0 0.0
    %50 = vmatpush1.msra.mxu0 %v25
    %51 = vmatprep.subr.mxu0 0.0
    %52 = vmatpush1.msra.mxu0 %v24
    %53 = vmatprep.subr.mxu0 0.0
    %54 = vmatpush1.msra.mxu0 %v23
    %55 = vmatprep.subr.mxu0 0.0
    %56 = vmatpush1.msra.mxu0 %v22
    %57 = vmatprep.subr.mxu0 0.0
    %58 = vmatpush1.msra.mxu0 %v21
    %59 = vmatprep.subr.mxu0 0.0
    %60 = vmatpush1.msra.mxu0 %v20
    %61 = vmatprep.subr.mxu0 0.0
    %62 = vmatpush1.msra.mxu0 %v19
    %63 = vmatprep.subr.mxu0 0.0
    %64 = vmatpush1.msra.mxu0 %v18
    %65 = vmatprep.subr.mxu0 0.0
    %66 = vmatpush1.msra.mxu0 %v17
    %67 = vmatprep.subr.mxu0 0.0
    %68 = vmatpush2.msra.mxu0 0.0
    %69 = vmatprep.subr.mxu0 0.0
    %70 = vmatpush2.msra.mxu0 0.0
    %71 = vmatprep.subr.mxu0 0.0
    %72 = vmatpush2.msra.mxu0 0.0
    %73 = vmatprep.subr.mxu0 0.0
    %74 = vmatpush2.msra.mxu0 0.0
    %75 = vmatprep.subr.mxu0 0.0
    %76 = vmatpush2.msra.mxu0 0.0
    %77 = vmatprep.subr.mxu0 0.0
    %78 = vmatpush2.msra.mxu0 0.0
    %79 = vmatprep.subr.mxu0 0.0
    %80 = vmatpush2.msra.mxu0 0.0
    %81 = vmatprep.subr.mxu0 0.0
    %82 = vmatpush2.msra.mxu0 0.0
    %83 = vmatprep.subr.mxu0 0.0
    %84 = vmatpush2.msra.mxu0 0.0
    %85 = vmatprep.subr.mxu0 0.0
    %86 = vmatpush2.msra.mxu0 0.0
    %87 = vmatprep.subr.mxu0 0.0
    %88 = vmatpush2.msra.mxu0 0.0
    %89 = vmatprep.subr.mxu0 0.0
    %90 = vmatpush2.msra.mxu0 0.0
    %91 = vmatprep.subr.mxu0 0.0
    %92 = vmatpush2.msra.mxu0 0.0
    %93 = vmatprep.subr.mxu0 0.0
    %94 = vmatpush2.msra.mxu0 0.0
    %95 = vmatprep.subr.mxu0 0.0
    %96 = vmatpush2.msra.mxu0 0.0
    %97 = vmatprep.subr.mxu0 0.0
    %98 = vmatpush2.msra.mxu0 0.0
    %99 = vmatprep.mubr.f32.mxu0 0.0
    %100 = vmatmul.mubr.f32.gmra.mxu0 %v16
    %v101 = vpop.f32.mrf.mxu0
    %v102 = vadd.f32 %v34, %v101
    %v103 = vpop.f32.mrf.mxu0
    %104 = vdwg.mxu0
    %v105 = vsub.f32 0.0, %v102
    %v106 = vmul.f32 %v105, 1.442695
    %v107 = vpow.pop %v106
    %v108 = vadd.f32 %v107, 1.0
    %v109 = vrcp.pop %v108
    %vm110 = vcmask 25600
    %111 = vst.msk [vmem:[#allocation3] sm:$0x3] %vm110, %v109
    // Predicated region
    $region14: #{tpu_custom_call.1} parent=1 // pred_check
      _
    $region15: #{tpu_custom_call.1} parent=1 // pred_check_branch
      %113 = sbr.rel (0) target = $region17
    $region16: #{tpu_custom_call.1} parent=1 // pred_region
      %s115 = ssub.s32 32, 32
      %116 = vsyncadd [#allocation4], %s115
      %s118 = sshll.u32 [#allocation3], 4
      %s119 = int_to_ptr.vmem [resolvable:$true] %s118
      %121 = dma.vmem_to_hbm [thread:$0]  %s119, 32, %s3, [#allocation4]
    $region17: #{tpu_custom_call.1} parent=1 // pred_fallthru
      _
    // Predicated region
    $region18: #{tpu_custom_call.1} parent=1 // pred_check
      _
    $region19: #{tpu_custom_call.1} parent=1 // pred_check_branch
      %123 = sbr.rel (0) target = $region21
    $region20: #{tpu_custom_call.1} parent=1 // pred_region
      %124 = dma.done [#allocation4], 32
    $region21: #{tpu_custom_call.1} parent=1 // pred_fallthru
      _
    %125 = vsyncpa [#allocation4], 1

</llo_original>
